<compile_context>
chip_gen: v7x
topology: tpu7x:2x2x1
jax: 0.10.0
libtpu: 0.0.40
codegen_flags: <defaults>
</compile_context>

<pallas_src>
import jax
import jax.numpy as jnp
from jax.experimental import pallas as pl
from jax.experimental.pallas import tpu as pltpu

_LANE = 128        # lane width
_SUBLANE = 16      # sublane multiple (covers bf16 packing too)
_MAX_TB = 256      # max batch-tile rows
_MAX_TD = 4096     # max feature-tile cols  (f32 block <= 4 MiB / input)
_PALLAS_MIN_ELEMS = 64 * 1024   # below this, pure JAX is faster than a launch


def _cdiv(a, b):
    return -(-a // b)


def _round_up(x, m):
    return _cdiv(x, m) * m


def _pick_tile(extent, unit, max_tile, prefer_splits=1):
    """Balanced tile size: a multiple of `unit`, <= max_tile.

    Does NOT require the tile to divide the extent (ragged last tile is
    handled by in-kernel masking), so awkward extents keep large tiles.
    `prefer_splits=2` asks for >= 2 tiles when the extent allows it (v7x
    megacore: the batch axis is the 'parallel' one).
    """
    padded = _round_up(extent, unit)
    n = max(_cdiv(padded, max_tile), min(prefer_splits, padded // unit), 1)
    return min(_round_up(_cdiv(extent, n), unit), max_tile)


def _make_huber_rowsum_kernel(clip_delta, with_weights, true_d, tile_d,
                              need_col_mask):
    clip_delta = float(clip_delta)
    n_lane_blocks = tile_d // _LANE

    def kernel(*refs):
        if with_weights:
            pred_ref, tgt_ref, w_ref, rowsum_ref = refs
        else:
            pred_ref, tgt_ref, rowsum_ref = refs
            w_ref = None

        # Feature-tile index j (grid axis 1) is the reduction axis; the output
        # block index is constant over j, so rowsum_ref stays resident in VMEM.
        @pl.when(pl.program_id(1) == 0)
        def _init():
            rowsum_ref[...] = jnp.zeros_like(rowsum_ref)

        # Cast to f32 after load (inputs may be bf16 to halve HBM traffic);
        # all accumulation is f32.
        diff = tgt_ref[...].astype(jnp.float32) - pred_ref[...].astype(jnp.float32)
        diff_abs = jnp.abs(diff)
        q = jnp.minimum(diff_abs, clip_delta)        # clamp(|d|, max=clip_delta)
        # 0.5*q^2 + clip_delta*(|d| - q) == q * (|d| - 0.5*q): 2 fewer VPU ops.
        loss = q * (diff_abs - 0.5 * q)
        if with_weights:
            loss = loss * w_ref[...].astype(jnp.float32)

        # Ragged last feature tile: zero out-of-bounds columns (block contents
        # past the logical extent are unspecified).  Ragged batch rows need no
        # mask -- they only feed output rows >= B, which the wrapper discards.
        if need_col_mask:
            col = (jax.lax.broadcasted_iota(jnp.int32, loss.shape, 1)
                   + pl.program_id(1) * tile_d)
            loss = jnp.where(col < true_d, loss, 0.0)

        # Per-lane partial sums: add the TD/128 lane-blocks into the (TB,128)
        # accumulator (pure VALU adds over existing vregs); the single
        # cross-lane reduce happens once, in the wrapper.
        partial = loss[:, 0:_LANE]
        for c in range(1, n_lane_blocks):
            partial = partial + loss[:, c * _LANE:(c + 1) * _LANE]
        rowsum_ref[...] += partial

    return kernel


def huber_loss_ref(output, target, weights=None, clip_delta=1.0,
                   reduction="mean"):
    """Pure-JAX reference mirroring the PyTorch module exactly."""
    output = output.astype(jnp.float32)
    target = target.astype(jnp.float32)
    diff = target - output
    diff_abs = jnp.abs(diff)
    quadratic_part = jnp.minimum(diff_abs, clip_delta)
    linear_part = diff_abs - quadratic_part
    loss = 0.5 * quadratic_part ** 2 + clip_delta * linear_part
    if weights is not None:
        loss = jnp.mean(loss * weights.astype(jnp.float32), axis=1)
    else:
        loss = jnp.mean(loss, axis=1)
    if reduction == "mean":
        loss = jnp.mean(loss)
    elif reduction == "sum":
        loss = jnp.sum(loss)
    return loss


def huber_loss_v0(output, target, weights=None, clip_delta=1.0,
                  reduction="mean", use_pallas=None):
    """JAX/Pallas equivalent of catalyst HuberLossV0.forward."""
    assert output.ndim == 2 and output.shape == target.shape
    reduction = reduction or "none"
    if reduction not in ("mean", "sum", "none"):
        raise ValueError(f"unsupported reduction: {reduction}")
    B, D = output.shape

    # Tiny inputs: the pallas_call launch dominates -- use the fused XLA path.
    if use_pallas is None:
        use_pallas = (B * D) >= _PALLAS_MIN_ELEMS
    if not use_pallas:
        return huber_loss_ref(output, target, weights, clip_delta, reduction)

    # Tile selection.  Batch axis prefers >= 2 tiles (v7x megacore); feature
    # axis gets the biggest tile <= _MAX_TD.  No divisibility requirement.
    TB = _pick_tile(B, _SUBLANE, _MAX_TB, prefer_splits=2)
    TD = _pick_tile(D, _LANE, _MAX_TD, prefer_splits=1)
    nb, nd = _cdiv(B, TB), _cdiv(D, TD)
    need_col_mask = (D % TD) != 0

    with_weights = weights is not None
    inputs = [output, target]
    if with_weights:
        assert weights.shape == output.shape
        inputs.append(weights)

    kernel = _make_huber_rowsum_kernel(clip_delta, with_weights, D, TD,
                                       need_col_mask)

    rows = pl.pallas_call(
        kernel,
        out_shape=jax.ShapeDtypeStruct((nb * TB, _LANE), jnp.float32),
        grid=(nb, nd),
        in_specs=[pl.BlockSpec((TB, TD), lambda i, j: (i, j)) for _ in inputs],
        out_specs=pl.BlockSpec((TB, _LANE), lambda i, j: (i, 0)),
        compiler_params=pltpu.CompilerParams(
            dimension_semantics=("parallel", "arbitrary"),
            vmem_limit_bytes=32 * 1024 * 1024,
        ),
    )(*inputs)

    # One cross-lane reduce, once, in the wrapper; rows >= B are discarded
    # (they may contain garbage from the ragged last batch tile).
    row_sums = jnp.sum(rows[:B], axis=1)
    if reduction == "none":
        return row_sums * (1.0 / D)                 # per-row mean over dim=1
    total = jnp.sum(row_sums)
    if reduction == "mean":
        return total * (1.0 / (B * D))              # mean over dim=1 then batch
    return total * (1.0 / D)                        # sum of per-row means


if __name__ == "__main__":
    key = jax.random.PRNGKey(0)
    k1, k2, k3 = jax.random.split(key, 3)

    # Small demo shapes (module default config: clip_delta=1.0, reduction='mean').
    B, D = 8, 32
    output = jax.random.normal(k1, (B, D), dtype=jnp.float32) * 2.0
    target = jax.random.normal(k2, (B, D), dtype=jnp.float32)
    weights = jax.random.uniform(k3, (B, D), dtype=jnp.float32)

    # Force the Pallas path even at demo size so the kernel actually runs.
    loss = huber_loss_v0(output, target, use_pallas=True)
    jax.block_until_ready(loss)
    ref = huber_loss_ref(output, target)
    assert jnp.allclose(loss, ref, atol=1e-5, rtol=1e-5), (loss, ref)

    # Weighted mean.
    loss_w = huber_loss_v0(output, target, weights=weights, use_pallas=True)
    ref_w = huber_loss_ref(output, target, weights=weights)
    assert jnp.allclose(loss_w, ref_w, atol=1e-5, rtol=1e-5), (loss_w, ref_w)

    # Sum and 'none' reductions.
    loss_s = huber_loss_v0(output, target, reduction="sum", use_pallas=True)
    ref_s = huber_loss_ref(output, target, reduction="sum")
    assert jnp.allclose(loss_s, ref_s, atol=1e-5, rtol=1e-5), (loss_s, ref_s)

    loss_n = huber_loss_v0(output, target, weights=weights, reduction="none",
                           use_pallas=True)
    ref_n = huber_loss_ref(output, target, weights=weights, reduction="none")
    assert jnp.allclose(loss_n, ref_n, atol=1e-5, rtol=1e-5), (loss_n, ref_n)

    # Non-aligned bf16 inputs: exercises ragged batch tile (24 rows, TB=16),
    # multi-tile feature reduction with a ragged, masked last tile, and the
    # in-kernel bf16 -> f32 cast.
    B2, D2 = 24, 5000
    o2 = jax.random.normal(k1, (B2, D2), dtype=jnp.bfloat16)
    t2 = jax.random.normal(k2, (B2, D2), dtype=jnp.bfloat16)
    loss2 = huber_loss_v0(o2, t2, clip_delta=0.7, reduction="mean",
                          use_pallas=True)
    jax.block_until_ready(loss2)
    ref2 = huber_loss_ref(o2, t2, clip_delta=0.7, reduction="mean")
    assert jnp.allclose(loss2, ref2, atol=2e-3, rtol=2e-3), (loss2, ref2)

    print("KERNEL_OK")
</pallas_src>

<mosaic_0001>
module attributes {stable_mosaic.version = 11 : i64} {
  func.func @kernel(%arg0: i32, %arg1: i32, %arg2: memref<16x128xf32, #tpu.memory_space<vmem>>, %arg3: memref<16x128xf32, #tpu.memory_space<vmem>>, %arg4: memref<16x128xf32, #tpu.memory_space<vmem>>) attributes {dimension_semantics = [#tpu.dimension_semantics<parallel>, #tpu.dimension_semantics<arbitrary>], iteration_bounds = array<i64: 1, 1>, scalar_prefetch = 0 : i64, scratch_operands = 0 : i64, tpu.core_type = #tpu.core_type<tc>, window_params = [{transform_indices = @transform_0, window_bounds = array<i64: 16, 128>}, {transform_indices = @transform_1, window_bounds = array<i64: 16, 128>}, {transform_indices = @transform_2, window_bounds = array<i64: 16, 128>}]} {
    %c0_i32 = arith.constant 0 : i32
    %0 = arith.cmpi eq, %arg1, %c0_i32 : i32
    %1 = arith.extui %0 : i1 to i32
    %c0_i32_0 = arith.constant 0 : i32
    %2 = arith.cmpi ne, %1, %c0_i32_0 : i32
    scf.if %2 {
      %cst_10 = arith.constant 0.000000e+00 : f32
      %24 = vector.broadcast %cst_10 : f32 to vector<16x128xf32>
      %c0_11 = arith.constant 0 : index
      %c0_12 = arith.constant 0 : index
      %25 = vector.load %arg4[%c0_11, %c0_12] : memref<16x128xf32, #tpu.memory_space<vmem>>, vector<16x128xf32>
      tpu.vector_store %arg4[%c0_11, %c0_12], %24 {strides = array<i32>} : memref<16x128xf32, #tpu.memory_space<vmem>>, vector<16x128xf32>,
    } else {
    }
    %c0 = arith.constant 0 : index
    %c0_1 = arith.constant 0 : index
    %3 = vector.load %arg3[%c0, %c0_1] : memref<16x128xf32, #tpu.memory_space<vmem>>, vector<16x128xf32>
    %c0_2 = arith.constant 0 : index
    %c0_3 = arith.constant 0 : index
    %4 = vector.load %arg2[%c0_2, %c0_3] : memref<16x128xf32, #tpu.memory_space<vmem>>, vector<16x128xf32>
    %5 = arith.subf %3, %4 : vector<16x128xf32>
    %6 = math.absf %5 : vector<16x128xf32>
    %cst = arith.constant 1.000000e+00 : f32
    %7 = vector.broadcast %cst : f32 to vector<16x128xf32>
    %8 = arith.minimumf %6, %7 : vector<16x128xf32>
    %cst_4 = arith.constant 5.000000e-01 : f32
    %9 = vector.broadcast %cst_4 : f32 to vector<16x128xf32>
    %10 = arith.mulf %9, %8 : vector<16x128xf32>
    %11 = arith.subf %6, %10 : vector<16x128xf32>
    %12 = arith.mulf %8, %11 : vector<16x128xf32>
    %13 = tpu.iota {dimensions = array<i32: 1>} : vector<16x128xi32>
    %c128_i32 = arith.constant 128 : i32
    %14 = arith.muli %arg1, %c128_i32 : i32
    %15 = vector.broadcast %14 : i32 to vector<16x128xi32>
    %16 = arith.addi %13, %15 : vector<16x128xi32>
    %c32_i32 = arith.constant 32 : i32
    %17 = vector.broadcast %c32_i32 : i32 to vector<16x128xi32>
    %18 = arith.cmpi slt, %16, %17 : vector<16x128xi32>
    %cst_5 = arith.constant 0.000000e+00 : f32
    %19 = vector.broadcast %cst_5 : f32 to vector<16x128xf32>
    %20 = arith.select %18, %12, %19 : vector<16x128xi1>, vector<16x128xf32>
    %c0_6 = arith.constant 0 : index
    %c0_7 = arith.constant 0 : index
    %21 = vector.load %arg4[%c0_6, %c0_7] : memref<16x128xf32, #tpu.memory_space<vmem>>, vector<16x128xf32>
    %22 = arith.addf %21, %20 : vector<16x128xf32>
    %c0_8 = arith.constant 0 : index
    %c0_9 = arith.constant 0 : index
    %23 = vector.load %arg4[%c0_8, %c0_9] : memref<16x128xf32, #tpu.memory_space<vmem>>, vector<16x128xf32>
    tpu.vector_store %arg4[%c0_8, %c0_9], %22 {strides = array<i32>} : memref<16x128xf32, #tpu.memory_space<vmem>>, vector<16x128xf32>,
    return
  }
  func.func @transform_0(%arg0: i32, %arg1: i32) -> (i32, i32) {
    %c0_i32 = arith.constant 0 : i32
    return %arg0, %arg1 : i32, i32
  }
  func.func @transform_1(%arg0: i32, %arg1: i32) -> (i32, i32) {
    %c0_i32 = arith.constant 0 : i32
    return %arg0, %arg1 : i32, i32
  }
  func.func @transform_2(%arg0: i32, %arg1: i32) -> (i32, i32) {
    %c0_i32 = arith.constant 0 : i32
    %c0_i32_0 = arith.constant 0 : i32
    return %arg0, %c0_i32 : i32, i32
  }
}

</mosaic_0001>

<llo_original>
// kernel: tpu_custom_call.1
$region0: #{tpu_custom_call.1}
  #allocation0 [shape = 'u32[]', space=smem, size = 0x4, offset = 0x4, fixed_abs, tag = 'smem constant byte address 0x4 - core index']
  #allocation1 [shape = 'u32[144,128]{1,0:T(1,128)}', space=vmem, size = 0x12000, scoped, tag = 'internal scratch']
  %s0 = inlined_call_operand.hbm [shape: f32[8,32], index: 0, kind: input, shape index: {}]
  %s1 = inlined_call_operand.hbm [shape: f32[8,32], index: 1, kind: input, shape index: {}]
  %s2 = inlined_call_operand.hbm [shape: f32[16,128], index: 2, kind: output, shape index: {}]
  %s3 = sld [smem:[#allocation0]]
  $region30: #{tpu_custom_call.1} parent=0
    _
  %s5 = ssub.s32 1, %s3
  %s6 = scalar_select 0, %s5, %s3
  $region1: #{tpu_custom_call.1} parent=0
    #allocation2 [shape = 'u8[8192]{0}', space=vmem, size = 0x2000, scoped, tag = 'input window, operand 0, single buffered']
    #allocation3 [shape = 's32[1]{0}', space=sflag, size = 0x4, scoped, tag = 'scoped memory for tpu_custom_call.1']
    #allocation4 [shape = 's32[1]{0}', space=sflag, size = 0x4, scoped, tag = 'scoped memory for tpu_custom_call.1']
    #allocation5 [shape = 'u8[8192]{0}', space=vmem, size = 0x2000, scoped, tag = 'input window, operand 1, single buffered']
    #allocation6 [shape = 's32[1]{0}', space=sflag, size = 0x4, scoped, tag = 'scoped memory for tpu_custom_call.1']
    #allocation7 [shape = 'u8[8192]{0}', space=vmem, size = 0x2000, scoped, tag = 'output window, operand 0, single buffered']
    %7 = vsyncpa [#allocation3], 0
    %8 = vsyncpa [#allocation6], 0
    %9 = vsyncpa [#allocation4], 0
    // Predicated region
    $region2: #{tpu_custom_call.1} parent=1 // pred_check
      _
    $region3: #{tpu_custom_call.1} parent=1 // pred_check_branch
      %11 = sbr.rel (0) target = $region5
    $region4: #{tpu_custom_call.1} parent=1 // pred_region
      %s13 = ssub.s32 256, 128
      %14 = vsyncadd [#allocation3], %s13
      %s15 = sshll.u32 [#allocation2], 4
      %s16 = int_to_ptr.vmem [resolvable:$true] %s15
      %21 = dma.hbm_to_vmem [thread:$0]  %s0, 128, %s16, [#allocation3], 128, 128, 8
    $region5: #{tpu_custom_call.1} parent=1 // pred_fallthru
      _
    // Predicated region
    $region6: #{tpu_custom_call.1} parent=1 // pred_check
      _
    $region7: #{tpu_custom_call.1} parent=1 // pred_check_branch
      %23 = sbr.rel (0) target = $region9
    $region8: #{tpu_custom_call.1} parent=1 // pred_region
      %s25 = ssub.s32 256, 128
      %26 = vsyncadd [#allocation6], %s25
      %s27 = sshll.u32 [#allocation5], 4
      %s28 = int_to_ptr.vmem [resolvable:$true] %s27
      %33 = dma.hbm_to_vmem [thread:$0]  %s1, 128, %s28, [#allocation6], 128, 128, 8
    $region9: #{tpu_custom_call.1} parent=1 // pred_fallthru
      _
    // Predicated region
    $region10: #{tpu_custom_call.1} parent=1 // pred_check
      _
    $region11: #{tpu_custom_call.1} parent=1 // pred_check_branch
      %35 = sbr.rel (0) target = $region13
    $region12: #{tpu_custom_call.1} parent=1 // pred_region
      %36 = dma.done [#allocation3], 256
    $region13: #{tpu_custom_call.1} parent=1 // pred_fallthru
      _
    // Predicated region
    $region14: #{tpu_custom_call.1} parent=1 // pred_check
      _
    $region15: #{tpu_custom_call.1} parent=1 // pred_check_branch
      %38 = sbr.rel (0) target = $region17
    $region16: #{tpu_custom_call.1} parent=1 // pred_region
      %39 = dma.done [#allocation6], 256
    $region17: #{tpu_custom_call.1} parent=1 // pred_fallthru
      _
    %p40 = scmp.eq.s32.totalorder 0, 0
    // Predicated region
    $region18: #{tpu_custom_call.1} parent=1 // pred_check
      %p41 = pneg %p40
    $region19: #{tpu_custom_call.1} parent=1 // pred_check_branch
      %43 = sbr.rel (%p41) target = $region21
    $region20: #{tpu_custom_call.1} parent=1 // pred_region
      %44 = vst [vmem:[#allocation7] sm:$0xff] 0.0
      %45 = vst [vmem:[#allocation7 + $0x8] sm:$0xff] 0.0
    $region21: #{tpu_custom_call.1} parent=1 // pred_fallthru
      _
    %v46 = vld [vmem:[#allocation5] sm:$0xff]
    %v47 = vld [vmem:[#allocation5 + $0x8] sm:$0xff]
    %v48 = vld [vmem:[#allocation2] sm:$0xff]
    %v49 = vld [vmem:[#allocation2 + $0x8] sm:$0xff]
    %v50 = vsub.f32 %v46, %v48
    %v51 = vsub.f32 %v47, %v49
    %v52 = vand.u32 2147483647, %v50
    %v53 = vand.u32 2147483647, %v51
    %v54 = vmin.f32 %v52, 1.0
    %v55 = vmin.f32 %v53, 1.0
    %v56 = vmul.f32 %v54, 0.5
    %v57 = vmul.f32 %v55, 0.5
    %v58 = vsub.f32 %v52, %v56
    %v59 = vsub.f32 %v53, %v57
    %v60 = vmul.f32 %v54, %v58
    %v61 = vmul.f32 %v55, %v59
    %v62 = vlaneseq
    %v63 = vand.u32 %v62, 127
    %s64 = smul.u32 0, 128
    %v65 = vstv %s64
    %v66 = vadd.s32 %v63, %v65
    %vm67 = vcmp.lt.s32.totalorder %v66, 32
    %v68 = vsel %vm67, %v60, 0.0
    %v69 = vsel %vm67, %v61, 0.0
    %v70 = vld [vmem:[#allocation7] sm:$0xff]
    %v71 = vld [vmem:[#allocation7 + $0x8] sm:$0xff]
    %v72 = vadd.f32 %v70, %v68
    %v73 = vadd.f32 %v71, %v69
    %74 = vst [vmem:[#allocation7] sm:$0xff] %v72
    %75 = vst [vmem:[#allocation7 + $0x8] sm:$0xff] %v73
    // Predicated region
    $region22: #{tpu_custom_call.1} parent=1 // pred_check
      _
    $region23: #{tpu_custom_call.1} parent=1 // pred_check_branch
      %77 = sbr.rel (0) target = $region25
    $region24: #{tpu_custom_call.1} parent=1 // pred_region
      %s79 = ssub.s32 256, 256
      %80 = vsyncadd [#allocation4], %s79
      %s81 = sshll.u32 [#allocation7], 4
      %s82 = int_to_ptr.vmem [resolvable:$true] %s81
      %87 = dma.vmem_to_hbm [thread:$0]  %s82, 256, %s2, [#allocation4], 128, 128, 8
    $region25: #{tpu_custom_call.1} parent=1 // pred_fallthru
      _
    // Predicated region
    $region26: #{tpu_custom_call.1} parent=1 // pred_check
      _
    $region27: #{tpu_custom_call.1} parent=1 // pred_check_branch
      %89 = sbr.rel (0) target = $region29
    $region28: #{tpu_custom_call.1} parent=1 // pred_region
      %90 = dma.done [#allocation4], 256
    $region29: #{tpu_custom_call.1} parent=1 // pred_fallthru
      _
    %91 = vsyncpa [#allocation3], 1
    %92 = vsyncpa [#allocation6], 1
    %93 = vsyncpa [#allocation4], 1

</llo_original>
